<compile_context>
chip_gen: v6e
topology: v6e:2x2x1
jax: 0.10.0
libtpu: 0.0.40
codegen_flags: <defaults>
</compile_context>

<pallas_src>
import functools
import math

import jax
import jax.numpy as jnp
from jax import lax
from jax.experimental import pallas as pl
from jax.experimental.pallas import tpu as pltpu


def _round_up(x, m):
    return ((x + m - 1) // m) * m


def _downsample_kernel(xph_ref, w1_ref, w2_ref, o_ref, xcat_ref, *, cin, wp2, hwp):
    """Fused conv3x3+ReLU -> invPixelShuffle(2) -> conv1x1+ReLU for one batch element.

    xph_ref  : (1, 4*cin, Lp)    phase-decomposed, flattened, zero-padded input.
                                 row  p*cin + ci  (p = py*2 + px)
                                 col  a*wp2 + b   == padded-image pixel (2a+py, 2b+px)
    w1_ref   : (4*cmid, 16*cin)  3x3 weights, K-concatenated over (shift t, phase p);
                                 zero where (t, p) is not a tap of that output phase.
    w2_ref   : (cout, 4*cmid)    1x1 weights regrouped to phase-major channel order.
    o_ref    : (1, cout, hwp)    lane-dense output (col = y2*wp2 + x2, padded to hwp).
    xcat_ref : (16*cin, hwp)     VMEM scratch holding the 4 shifted window slabs.
    """
    c4 = 4 * cin
    # Gather the 4 shifted phase slabs (shifts 0, 1, wp2, wp2+1).  Only 3 slices are
    # lane-unaligned -- down from 27 in the per-tap version.
    for t, s in enumerate((0, 1, wp2, wp2 + 1)):
        xcat_ref[t * c4:(t + 1) * c4, :] = xph_ref[0, :, s:s + hwp]

    xcat = xcat_ref[...].astype(jnp.float32)                       # (16*cin, hwp)
    # Stage 1: all 4 output phases of the 3x3 conv in ONE MXU matmul (K = 16*cin).
    y1 = jnp.maximum(
        jnp.dot(w1_ref[...], xcat, preferred_element_type=jnp.float32), 0.0)
    # Stage 2: invPixelShuffle + 1x1 conv == contraction over (phase, cmid).
    z = jnp.maximum(
        jnp.dot(w2_ref[...], y1, preferred_element_type=jnp.float32), 0.0)
    o_ref[0] = z.astype(o_ref.dtype)


def downsample_forward(x, w1, w2):
    """x: (N, C, H, W); w1: (C, C, 3, 3); w2: (C, 4*C, 1, 1). Returns (N, C, H/2, W/2)."""
    N, Cin, H, W = x.shape
    assert H % 2 == 0 and W % 2 == 0, "invPixelShuffle(2) requires even H, W"
    Cmid = w1.shape[0]
    Cout = w2.shape[0]
    assert w1.shape[1] == Cin and w2.shape[1] == 4 * Cmid

    H2, W2 = H // 2, W // 2
    Hp2, Wp2 = H2 + 1, W2 + 1              # phase-grid extents of the halo-padded image
    hw = H2 * Wp2                          # valid output columns (padded-width grid)
    hwp = _round_up(hw, 128)               # lane-dense compute/output width
    Lp = _round_up(hwp + Wp2 + 1, 128)     # input slab width (covers max window shift)

    # --- wrapper layout plumbing: conv halo pad + space-to-depth phase split ---
    # TODO(synk): this relayout is an extra input-sized HBM round trip; folding it into
    #             the pallas_call index_map gives a lane dim of 2 (worse) -- accepted.
    xpad = jnp.pad(x, ((0, 0), (0, 0), (1, 1), (1, 1)))                  # (N,Cin,H+2,W+2)
    xph = xpad.reshape(N, Cin, Hp2, 2, Wp2, 2)                           # (n,ci,a,py,b,px)
    xph = xph.transpose(0, 3, 5, 1, 2, 4).reshape(N, 4 * Cin, Hp2 * Wp2)
    xph = jnp.pad(xph, ((0, 0), (0, 0), (0, Lp - Hp2 * Wp2)))            # (N,4Cin,Lp)

    # --- stage-1 weights: K-concatenated (4*Cmid, 16*Cin) with zero-padded blocks ---
    # col = (qy*2+qx)*4*Cin + (py*2+px)*Cin + ci ; row = (ry*2+rx)*Cmid + co
    w1f = w1.astype(jnp.float32)
    w1cat = jnp.zeros((4 * Cmid, 16 * Cin), jnp.float32)
    for ry in range(2):
        for rx in range(2):
            for dy in range(3):
                for dx in range(3):
                    py, qy = (ry + dy) % 2, (ry + dy) // 2
                    px, qx = (rx + dx) % 2, (rx + dx) // 2
                    row0 = (ry * 2 + rx) * Cmid
                    col0 = (qy * 2 + qx) * 4 * Cin + (py * 2 + px) * Cin
                    w1cat = w1cat.at[row0:row0 + Cmid, col0:col0 + Cin].set(
                        w1f[:, :, dy, dx])

    # --- stage-2 weights: (Cout, 4*Cmid) in phase-major channel order ---
    # invPixelShuffle channel order is c*4 + (ry*2+rx); y1 rows are (ry*2+rx)*Cmid + c.
    w2r = jnp.transpose(w2.reshape(Cout, Cmid, 4).astype(jnp.float32), (0, 2, 1))
    w2r = w2r.reshape(Cout, 4 * Cmid)

    kernel = functools.partial(_downsample_kernel, cin=Cin, wp2=Wp2, hwp=hwp)

    itemsize = x.dtype.itemsize
    block_bytes = (2 * 4 * Cin * Lp * itemsize            # double-buffered input block
                   + 2 * Cout * hwp * itemsize            # double-buffered output block
                   + (w1cat.size + w2r.size) * 4          # weights
                   + 16 * Cin * hwp * itemsize            # xcat scratch
                   + 2 * (4 * Cmid + Cout) * hwp * 4)     # y1 / z temporaries (f32)
    vmem_limit = max(32 * 1024 * 1024, 2 * int(block_bytes))
    try:
        cap = pltpu.get_tpu_info().vmem_capacity_bytes
        vmem_limit = min(vmem_limit, (3 * cap) // 4)
    except Exception:
        vmem_limit = min(vmem_limit, 64 * 1024 * 1024)

    flops = 2 * N * hw * (4 * Cmid * 16 * Cin + Cout * 4 * Cmid)
    bytes_accessed = (xph.size * itemsize + N * Cout * hwp * itemsize
                      + (w1cat.size + w2r.size) * 4)
    cost = pl.CostEstimate(flops=int(flops), transcendentals=0,
                           bytes_accessed=int(bytes_accessed))

    # TODO(synk): for realistic shapes (e.g. C=64, 256x256) add a spatial grid axis over
    #             phase-rows (1-row halo) so per-step VMEM stays within v7x's 64 MiB and
    #             both v7x TensorCores get work when N <= 2.
    out = pl.pallas_call(
        kernel,
        out_shape=jax.ShapeDtypeStruct((N, Cout, hwp), x.dtype),
        grid_spec=pltpu.PrefetchScalarGridSpec(
            num_scalar_prefetch=0,
            grid=(N,),
            in_specs=[
                pl.BlockSpec((1, 4 * Cin, Lp), lambda n: (n, 0, 0)),
                pl.BlockSpec((4 * Cmid, 16 * Cin), lambda n: (0, 0)),
                pl.BlockSpec((Cout, 4 * Cmid), lambda n: (0, 0)),
            ],
            out_specs=pl.BlockSpec((1, Cout, hwp), lambda n: (n, 0, 0)),
            scratch_shapes=[pltpu.VMEM((16 * Cin, hwp), x.dtype)],
        ),
        compiler_params=pltpu.CompilerParams(
            dimension_semantics=("parallel",),
            vmem_limit_bytes=int(vmem_limit)),
        cost_estimate=cost,
    )(xph, w1cat, w2r)

    # Drop padded lanes and the padded-width garbage column; reshape is layout-preserving.
    return out[..., :hw].reshape(N, Cout, H2, Wp2)[..., :W2]


def downsample_reference(x, w1, w2):
    """Pure-JAX mirror of the PyTorch DownSample forward (act='ReLU', norm=None)."""
    y = lax.conv_general_dilated(
        x, w1, window_strides=(1, 1), padding=((1, 1), (1, 1)),
        dimension_numbers=("NCHW", "OIHW", "NCHW"),
        precision=lax.Precision.HIGHEST)
    y = jnp.maximum(y, 0.0)
    N, C, H, W = y.shape
    r = 2
    t = y.reshape(N, C, H // r, r, W // r, r)
    t = t.transpose(0, 1, 3, 5, 2, 4).reshape(N, C * r * r, H // r, W // r)
    z = lax.conv_general_dilated(
        t, w2, window_strides=(1, 1), padding="VALID",
        dimension_numbers=("NCHW", "OIHW", "NCHW"),
        precision=lax.Precision.HIGHEST)
    return jnp.maximum(z, 0.0)


if __name__ == "__main__":
    key = jax.random.PRNGKey(0)
    k1, k2, k3 = jax.random.split(key, 3)

    N, C, H, W = 2, 4, 16, 16                         # small shapes consistent with the module
    x = jax.random.normal(k1, (N, C, H, W), dtype=jnp.float32)
    w1 = jax.random.normal(k2, (C, C, 3, 3), dtype=jnp.float32) * (1.0 / math.sqrt(C * 9))
    w2 = jax.random.normal(k3, (C, 4 * C, 1, 1), dtype=jnp.float32) * (1.0 / math.sqrt(4 * C))

    y = downsample_forward(x, w1, w2)
    y = jax.block_until_ready(y)

    ref = downsample_reference(x, w1, w2)
    assert y.shape == ref.shape == (N, C, H // 2, W // 2)
    assert y.dtype == x.dtype
    max_err = float(jnp.max(jnp.abs(y - ref)))
    assert jnp.allclose(y, ref, atol=1e-4, rtol=1e-4), f"max abs err = {max_err}"

    print("KERNEL_OK")
</pallas_src>

<mosaic_0001>
module attributes {stable_mosaic.version = 11 : i64} {
  func.func @_downsample_kernel(%arg0: i32, %arg1: memref<1x16x256xf32, #tpu.memory_space<vmem>>, %arg2: memref<16x64xf32, #tpu.memory_space<vmem>>, %arg3: memref<4x16xf32, #tpu.memory_space<vmem>>, %arg4: memref<1x4x128xf32, #tpu.memory_space<vmem>>, %arg5: memref<64x128xf32, #tpu.memory_space<vmem>>) attributes {dimension_semantics = [#tpu.dimension_semantics<parallel>], iteration_bounds = array<i64: 2>, scalar_prefetch = 0 : i64, scratch_operands = 1 : i64, tpu.core_type = #tpu.core_type<tc>, window_params = [{transform_indices = @transform_0, window_bounds = array<i64: 1, 16, 256>}, {pipeline_mode = #tpu.pipeline_mode<synchronous>, transform_indices = @transform_1, window_bounds = array<i64: 16, 64>}, {pipeline_mode = #tpu.pipeline_mode<synchronous>, transform_indices = @transform_2, window_bounds = array<i64: 4, 16>}, {transform_indices = @transform_3, window_bounds = array<i64: 1, 4, 128>}]} {
    %c0 = arith.constant 0 : index
    %c0_0 = arith.constant 0 : index
    %c0_1 = arith.constant 0 : index
    %0 = vector.load %arg1[%c0, %c0_0, %c0_1] : memref<1x16x256xf32, #tpu.memory_space<vmem>>, vector<1x16x128xf32>
    %1 = vector.shape_cast %0 : vector<1x16x128xf32> to vector<16x128xf32>
    %c0_2 = arith.constant 0 : index
    %c0_3 = arith.constant 0 : index
    %2 = vector.load %arg5[%c0_2, %c0_3] : memref<64x128xf32, #tpu.memory_space<vmem>>, vector<16x128xf32>
    tpu.vector_store %arg5[%c0_2, %c0_3], %1 {strides = array<i32>} : memref<64x128xf32, #tpu.memory_space<vmem>>, vector<16x128xf32>,
    %c0_4 = arith.constant 0 : index
    %c0_5 = arith.constant 0 : index
    %c1 = arith.constant 1 : index
    %3 = vector.load %arg1[%c0_4, %c0_5, %c1] : memref<1x16x256xf32, #tpu.memory_space<vmem>>, vector<1x16x128xf32>
    %4 = vector.shape_cast %3 : vector<1x16x128xf32> to vector<16x128xf32>
    %c16 = arith.constant 16 : index
    %c0_6 = arith.constant 0 : index
    %5 = vector.load %arg5[%c16, %c0_6] : memref<64x128xf32, #tpu.memory_space<vmem>>, vector<16x128xf32>
    tpu.vector_store %arg5[%c16, %c0_6], %4 {strides = array<i32>} : memref<64x128xf32, #tpu.memory_space<vmem>>, vector<16x128xf32>,
    %c0_7 = arith.constant 0 : index
    %c0_8 = arith.constant 0 : index
    %c9 = arith.constant 9 : index
    %6 = vector.load %arg1[%c0_7, %c0_8, %c9] : memref<1x16x256xf32, #tpu.memory_space<vmem>>, vector<1x16x128xf32>
    %7 = vector.shape_cast %6 : vector<1x16x128xf32> to vector<16x128xf32>
    %c32 = arith.constant 32 : index
    %c0_9 = arith.constant 0 : index
    %8 = vector.load %arg5[%c32, %c0_9] : memref<64x128xf32, #tpu.memory_space<vmem>>, vector<16x128xf32>
    tpu.vector_store %arg5[%c32, %c0_9], %7 {strides = array<i32>} : memref<64x128xf32, #tpu.memory_space<vmem>>, vector<16x128xf32>,
    %c0_10 = arith.constant 0 : index
    %c0_11 = arith.constant 0 : index
    %c10 = arith.constant 10 : index
    %9 = vector.load %arg1[%c0_10, %c0_11, %c10] : memref<1x16x256xf32, #tpu.memory_space<vmem>>, vector<1x16x128xf32>
    %10 = vector.shape_cast %9 : vector<1x16x128xf32> to vector<16x128xf32>
    %c48 = arith.constant 48 : index
    %c0_12 = arith.constant 0 : index
    %11 = vector.load %arg5[%c48, %c0_12] : memref<64x128xf32, #tpu.memory_space<vmem>>, vector<16x128xf32>
    tpu.vector_store %arg5[%c48, %c0_12], %10 {strides = array<i32>} : memref<64x128xf32, #tpu.memory_space<vmem>>, vector<16x128xf32>,
    %c0_13 = arith.constant 0 : index
    %c0_14 = arith.constant 0 : index
    %12 = vector.load %arg5[%c0_13, %c0_14] : memref<64x128xf32, #tpu.memory_space<vmem>>, vector<64x128xf32>
    %c0_15 = arith.constant 0 : index
    %c0_16 = arith.constant 0 : index
    %13 = vector.load %arg2[%c0_15, %c0_16] : memref<16x64xf32, #tpu.memory_space<vmem>>, vector<16x64xf32>
    %cst = arith.constant dense<0.000000e+00> : vector<16x128xf32>
    %14 = tpu.matmul %13, %12, %cst {dimension_numbers = #tpu.dot_dimension_numbers<[1], [0], [0], [1], [0, 0, 1, 1], [], []>} : vector<16x64xf32>, vector<64x128xf32>, vector<16x128xf32> -> vector<16x128xf32>
    %cst_17 = arith.constant 0.000000e+00 : f32
    %15 = vector.broadcast %cst_17 : f32 to vector<16x128xf32>
    %16 = arith.maximumf %14, %15 : vector<16x128xf32>
    %c0_18 = arith.constant 0 : index
    %c0_19 = arith.constant 0 : index
    %17 = vector.load %arg3[%c0_18, %c0_19] : memref<4x16xf32, #tpu.memory_space<vmem>>, vector<4x16xf32>
    %cst_20 = arith.constant dense<0.000000e+00> : vector<4x128xf32>
    %18 = tpu.matmul %17, %16, %cst_20 {dimension_numbers = #tpu.dot_dimension_numbers<[1], [0], [0], [1], [0, 0, 1, 1], [], []>} : vector<4x16xf32>, vector<16x128xf32>, vector<4x128xf32> -> vector<4x128xf32>
    %cst_21 = arith.constant 0.000000e+00 : f32
    %19 = vector.broadcast %cst_21 : f32 to vector<4x128xf32>
    %20 = arith.maximumf %18, %19 : vector<4x128xf32>
    %c0_22 = arith.constant 0 : index
    %c0_23 = arith.constant 0 : index
    %c0_24 = arith.constant 0 : index
    %21 = vector.load %arg4[%c0_22, %c0_23, %c0_24] : memref<1x4x128xf32, #tpu.memory_space<vmem>>, vector<1x4x128xf32>
    %22 = vector.shape_cast %21 : vector<1x4x128xf32> to vector<4x128xf32>
    %23 = vector.shape_cast %20 : vector<4x128xf32> to vector<1x4x128xf32>
    tpu.vector_store %arg4[%c0_22, %c0_23, %c0_24], %23 {strides = array<i32>} : memref<1x4x128xf32, #tpu.memory_space<vmem>>, vector<1x4x128xf32>,
    return
  }
  func.func @transform_0(%arg0: i32) -> (i32, i32, i32) {
    %c0_i32 = arith.constant 0 : i32
    %c0_i32_0 = arith.constant 0 : i32
    %c0_i32_1 = arith.constant 0 : i32
    return %arg0, %c0_i32, %c0_i32_0 : i32, i32, i32
  }
  func.func @transform_1(%arg0: i32) -> (i32, i32) {
    %c0_i32 = arith.constant 0 : i32
    %c0_i32_0 = arith.constant 0 : i32
    %c0_i32_1 = arith.constant 0 : i32
    return %c0_i32, %c0_i32_0 : i32, i32
  }
  func.func @transform_2(%arg0: i32) -> (i32, i32) {
    %c0_i32 = arith.constant 0 : i32
    %c0_i32_0 = arith.constant 0 : i32
    %c0_i32_1 = arith.constant 0 : i32
    return %c0_i32, %c0_i32_0 : i32, i32
  }
  func.func @transform_3(%arg0: i32) -> (i32, i32, i32) {
    %c0_i32 = arith.constant 0 : i32
    %c0_i32_0 = arith.constant 0 : i32
    %c0_i32_1 = arith.constant 0 : i32
    return %arg0, %c0_i32, %c0_i32_0 : i32, i32, i32
  }
}

</mosaic_0001>

<llo_original>
// kernel: tpu_custom_call.1
$region0: #{tpu_custom_call.1}
  #allocation0 [shape = 'u32[]', space=smem, size = 0x4, offset = 0x4, fixed_abs, tag = 'smem constant byte address 0x4 - core index']
  #allocation1 [shape = 'u32[144,128]{1,0:T(1,128)}', space=vmem, size = 0x12000, scoped, tag = 'internal scratch']
  #allocation2 [shape = 'f32[64,128]{1,0:T(8,128)}', space=vmem, size = 0x8000, scoped, tag = 'scratch operand']
  %s0 = inlined_call_operand.hbm [shape: f32[2,16,256], index: 0, kind: input, shape index: {}]
  %s1 = inlined_call_operand.hbm [shape: f32[16,64], index: 1, kind: input, shape index: {}]
  %s2 = inlined_call_operand.hbm [shape: f32[4,16], index: 2, kind: input, shape index: {}]
  %s3 = inlined_call_operand.hbm [shape: f32[2,4,128], index: 3, kind: output, shape index: {}]
  %s4 = sld [smem:[#allocation0]]
  $region57: #{tpu_custom_call.1} parent=0
    _
  %s6 = ssub.s32 1, %s4
  %s7 = scalar_select 0, %s6, %s4
  $region1: #{tpu_custom_call.1} parent=0
    #allocation3 [shape = 'u8[32768]{0}', space=vmem, size = 0x8000, scoped, tag = 'input window, operand 0']
    #allocation4 [shape = 's32[2]{0}', space=sflag, size = 0x8, scoped, tag = 'scoped memory for tpu_custom_call.1']
    #allocation5 [shape = 's32[2]{0}', space=sflag, size = 0x8, scoped, tag = 'scoped memory for tpu_custom_call.1']
    #allocation6 [shape = 'u8[8192]{0}', space=vmem, size = 0x2000, scoped, tag = 'input window, operand 1, single buffered']
    #allocation7 [shape = 's32[1]{0}', space=sflag, size = 0x4, scoped, tag = 'scoped memory for tpu_custom_call.1']
    #allocation8 [shape = 'u8[2048]{0}', space=vmem, size = 0x800, scoped, tag = 'input window, operand 2, single buffered']
    #allocation9 [shape = 'u8[4096]{0}', space=vmem, size = 0x1000, scoped, tag = 'output window, operand 0']
    %8 = vsyncpa [#allocation4], 0
    %s9 = scalar_lea.sflag [#allocation4], 1
    %10 = vsyncpa %s9, 0
    %11 = vsyncpa [#allocation7], 0
    %12 = vsyncpa [#allocation5], 0
    %s13 = scalar_lea.sflag [#allocation5], 1
    %14 = vsyncpa %s13, 0
    loop: start=0, step=1, limit=4
    $region2: #{tpu_custom_call.1} parent=1 // loop_pre_header
      _
    $region3: #{tpu_custom_call.1} parent=1 // loop_header
      %s16 = sphi 0, %s20
      %p17 = scmp.ge.s32.totalorder %s16, 4
      %s26 = sphi 0, %s28
      %s29 = sphi 0, %s26
      %s30 = sphi 0, %s29
      %s46 = sphi 0, %s30
      %s50 = sphi 0, %s50
      %s52 = sphi 0, %s50
      %s53 = sphi 0, %s52
      %s67 = sphi 0, %s53
      %s71 = sphi 0, %s71
      %s73 = sphi 0, %s71
      %s74 = sphi 0, %s73
      %s88 = sphi 0, %s74
      %s94 = sphi 0, %s96
      %s97 = sphi 0, %s94
      %s98 = sphi 0, %s97
      %s114 = sphi 0, %s98
    $region4: #{tpu_custom_call.1} parent=1 // loop_header_branch
      %19 = sbr.rel (%p17) target = $region8
    $region5: #{tpu_custom_call.1} parent=1 // loop_body
      %s21 = ssub.s32 %s16, 1
      %s22 = ssub.s32 %s16, 2
      %s23 = sadd.s32 %s16, 1
      %s24 = ssub.s32 %s16, %s23
      %p25 = scmp.eq.s32.totalorder %s24, 0
      %s27 = sadd.s32 %s26, 1
      %s28 = scalar_select %p25, %s26, %s27
      %p31 = pneg %p25
      %p32 = scmp.eq.s32.totalorder %s16, 1
      %p33 = por %p31, %p32
      %p34 = scmp.ne.s32.totalorder %s26, %s29
      %p35 = scmp.eq.s32.totalorder %s16, 0
      %p36 = por %p34, %p35
      %p37 = scmp.ne.s32.totalorder %s26, %s29
      %p38 = scmp.eq.s32.totalorder %s21, 1
      %p39 = por %p37, %p38
      %p40 = scmp.ne.s32.totalorder %s29, %s30
      %p41 = scmp.eq.s32.totalorder %s21, 0
      %p42 = por %p40, %p41
      %p43 = scmp.ne.s32.totalorder %s29, %s30
      %p44 = scmp.eq.s32.totalorder %s22, 1
      %p45 = por %p43, %p44
      %p47 = scmp.ne.s32.totalorder %s30, %s46
      %p48 = scmp.eq.s32.totalorder %s22, 0
      %p49 = por %p47, %p48
      %s51 = sadd.s32 %s50, 1
      %p54 = scmp.eq.s32.totalorder %s16, 1
      %p55 = scmp.ne.s32.totalorder %s50, %s52
      %p56 = scmp.eq.s32.totalorder %s16, 0
      %p57 = por %p55, %p56
      %p58 = scmp.ne.s32.totalorder %s50, %s52
      %p59 = scmp.eq.s32.totalorder %s21, 1
      %p60 = por %p58, %p59
      %p61 = scmp.ne.s32.totalorder %s52, %s53
      %p62 = scmp.eq.s32.totalorder %s21, 0
      %p63 = por %p61, %p62
      %p64 = scmp.ne.s32.totalorder %s52, %s53
      %p65 = scmp.eq.s32.totalorder %s22, 1
      %p66 = por %p64, %p65
      %p68 = scmp.ne.s32.totalorder %s53, %s67
      %p69 = scmp.eq.s32.totalorder %s22, 0
      %p70 = por %p68, %p69
      %s72 = sadd.s32 %s71, 1
      %p75 = scmp.eq.s32.totalorder %s16, 1
      %p76 = scmp.ne.s32.totalorder %s71, %s73
      %p77 = scmp.eq.s32.totalorder %s16, 0
      %p78 = por %p76, %p77
      %p79 = scmp.ne.s32.totalorder %s71, %s73
      %p80 = scmp.eq.s32.totalorder %s21, 1
      %p81 = por %p79, %p80
      %p82 = scmp.ne.s32.totalorder %s73, %s74
      %p83 = scmp.eq.s32.totalorder %s21, 0
      %p84 = por %p82, %p83
      %p85 = scmp.ne.s32.totalorder %s73, %s74
      %p86 = scmp.eq.s32.totalorder %s22, 1
      %p87 = por %p85, %p86
      %p89 = scmp.ne.s32.totalorder %s74, %s88
      %p90 = scmp.eq.s32.totalorder %s22, 0
      %p91 = por %p89, %p90
      %s92 = ssub.s32 %s16, %s23
      %p93 = scmp.eq.s32.totalorder %s92, 0
      %s95 = sadd.s32 %s94, 1
      %s96 = scalar_select %p93, %s94, %s95
      %p99 = pneg %p93
      %p100 = scmp.eq.s32.totalorder %s16, 1
      %p101 = por %p99, %p100
      %p102 = scmp.ne.s32.totalorder %s94, %s97
      %p103 = scmp.eq.s32.totalorder %s16, 0
      %p104 = por %p102, %p103
      %p105 = scmp.ne.s32.totalorder %s94, %s97
      %p106 = scmp.eq.s32.totalorder %s21, 1
      %p107 = por %p105, %p106
      %p108 = scmp.ne.s32.totalorder %s97, %s98
      %p109 = scmp.eq.s32.totalorder %s21, 0
      %p110 = por %p108, %p109
      %p111 = scmp.ne.s32.totalorder %s97, %s98
      %p112 = scmp.eq.s32.totalorder %s22, 1
      %p113 = por %p111, %p112
      %p115 = scmp.ne.s32.totalorder %s98, %s114
      %p116 = scmp.eq.s32.totalorder %s22, 0
      %p117 = por %p115, %p116
      %p118 = scmp.le.s32.totalorder 1, %s16
      %p119 = scmp.lt.s32.totalorder %s16, 3
      %p120 = pnand %p118, %p119
      %p121 = pneg %p120
      // Predicated region
      $region9: #{tpu_custom_call.1} parent=5 // pred_check
        _
      $region10: #{tpu_custom_call.1} parent=5 // pred_check_branch
        %123 = sbr.rel (%p120) target = $region12
      $region11: #{tpu_custom_call.1} parent=5 // pred_region
        %s124 = ssub.s32 %s16, 1
        // Predicated region
        $region13: #{tpu_custom_call.1} parent=11 // pred_check
          %p125 = pneg %p63
        $region14: #{tpu_custom_call.1} parent=11 // pred_check_branch
          %127 = sbr.rel (%p125) target = $region16
        $region15: #{tpu_custom_call.1} parent=11 // pred_region
          %s129 = ssub.s32 256, 256
          %130 = vsyncadd [#allocation7], %s129
          %s131 = sshll.u32 [#allocation6], 4
          %s132 = int_to_ptr.vmem [resolvable:$true] %s131
          %137 = dma.hbm_to_vmem [thread:$0]  %s1, 256, %s132, [#allocation7], 128, 128, 8
        $region16: #{tpu_custom_call.1} parent=11 // pred_fallthru
          _
        // Predicated region
        $region17: #{tpu_custom_call.1} parent=11 // pred_check
          %p138 = pneg %p84
        $region18: #{tpu_custom_call.1} parent=11 // pred_check_branch
          %140 = sbr.rel (%p138) target = $region20
        $region19: #{tpu_custom_call.1} parent=11 // pred_region
          %s142 = ssub.s32 64, 64
          %143 = vsyncadd [#allocation7], %s142
          %s145 = sshll.u32 [#allocation8], 4
          %s146 = int_to_ptr.vmem [resolvable:$true] %s145
          %148 = dma.hbm_to_vmem [thread:$0]  %s2, 64, %s146, [#allocation7]
        $region20: #{tpu_custom_call.1} parent=11 // pred_fallthru
          _
      $region12: #{tpu_custom_call.1} parent=5 // pred_fallthru
        _
      %p149 = scmp.lt.s32.totalorder %s16, 2
      // Predicated region
      $region21: #{tpu_custom_call.1} parent=5 // pred_check
        %p150 = pneg %p149
      $region22: #{tpu_custom_call.1} parent=5 // pred_check_branch
        %152 = sbr.rel (%p150) target = $region24
      $region23: #{tpu_custom_call.1} parent=5 // pred_region
        // Predicated region
        $region25: #{tpu_custom_call.1} parent=23 // pred_check
          %p153 = pneg %p36
        $region26: #{tpu_custom_call.1} parent=23 // pred_check_branch
          %155 = sbr.rel (%p153) target = $region28
        $region27: #{tpu_custom_call.1} parent=23 // pred_region
          %s156 = sand.u32 %s26, 1
          %s157 = scalar_lea.sflag [#allocation4], %s156
          %s158 = sand.u32 %s26, 1
          %s159 = smul.addr %s158, 32
          %s160 = scalar_lea.vmem [#allocation3], %s159
          %s162 = ssub.s32 512, 512
          %163 = vsyncadd %s157, %s162
          %s164 = smul.addr %s16, 4
          %s165 = smul.addr %s164, 128
          %s166 = scalar_lea.hbm %s0, %s165
          %s167 = sshll.u32 %s160, 4
          %s168 = int_to_ptr.vmem [resolvable:$true] %s167
          %173 = dma.hbm_to_vmem [thread:$0]  %s166, 512, %s168, %s157, 256, 256, 16
        $region28: #{tpu_custom_call.1} parent=23 // pred_fallthru
          _
      $region24: #{tpu_custom_call.1} parent=5 // pred_fallthru
        _
      %p174 = scmp.le.s32.totalorder 1, %s16
      %p175 = scmp.lt.s32.totalorder %s16, 3
      %p176 = pnand %p174, %p175
      %p177 = pneg %p176
      // Predicated region
      $region29: #{tpu_custom_call.1} parent=5 // pred_check
        _
      $region30: #{tpu_custom_call.1} parent=5 // pred_check_branch
        %179 = sbr.rel (%p176) target = $region32
      $region31: #{tpu_custom_call.1} parent=5 // pred_region
        %s180 = ssub.s32 %s16, 1
        %s181 = sand.u32 %s29, 1
        %s182 = scalar_lea.sflag [#allocation4], %s181
        %s183 = sand.u32 %s29, 1
        %s184 = smul.addr %s183, 32
        %s185 = scalar_lea.vmem [#allocation3], %s184
        // Predicated region
        $region33: #{tpu_custom_call.1} parent=31 // pred_check
          %p186 = pneg %p42
        $region34: #{tpu_custom_call.1} parent=31 // pred_check_branch
          %188 = sbr.rel (%p186) target = $region36
        $region35: #{tpu_custom_call.1} parent=31 // pred_region
          %189 = dma.done %s182, 512
        $region36: #{tpu_custom_call.1} parent=31 // pred_fallthru
          _
        // Predicated region
        $region37: #{tpu_custom_call.1} parent=31 // pred_check
          %p190 = pneg %p63
        $region38: #{tpu_custom_call.1} parent=31 // pred_check_branch
          %192 = sbr.rel (%p190) target = $region40
        $region39: #{tpu_custom_call.1} parent=31 // pred_region
          %193 = dma.done [#allocation7], 256
        $region40: #{tpu_custom_call.1} parent=31 // pred_fallthru
          _
        // Predicated region
        $region41: #{tpu_custom_call.1} parent=31 // pred_check
          %p194 = pneg %p84
        $region42: #{tpu_custom_call.1} parent=31 // pred_check_branch
          %196 = sbr.rel (%p194) target = $region44
        $region43: #{tpu_custom_call.1} parent=31 // pred_region
          %197 = dma.done [#allocation7], 64
        $region44: #{tpu_custom_call.1} parent=31 // pred_fallthru
          _
        %s198 = sand.u32 %s29, 1
        %s199 = scalar_lea.sflag [#allocation4], %s198
        %s200 = sand.u32 %s29, 1
        %s201 = smul.addr %s200, 32
        %s202 = scalar_lea.vmem [#allocation3], %s201
        %p203 = pneg %p42
        %p204 = pneg %p39
        %p205 = pneg %p63
        %p206 = pneg %p60
        %p207 = pneg %p84
        %p208 = pneg %p81
        %p209 = pneg %p110
        %p210 = pneg %p107
        %s211 = sand.u32 %s97, 1
        %s212 = scalar_lea.sflag [#allocation5], %s211
        %s213 = sand.u32 %s97, 1
        %s214 = smul.addr %s213, 4
        %s215 = scalar_lea.vmem [#allocation9], %s214
        %v216 = vld [vmem:[%s185] sm:$0xff]
        %v217 = vld [vmem:[%s185 + $0x10] sm:$0xff]
        %218 = vst [vmem:[#allocation2] sm:$0xff] %v216
        %219 = vst [vmem:[#allocation2 + $0x8] sm:$0xff] %v217
        %v220 = vld [vmem:[%s185] sm:$0xff]
        %v221 = vld [vmem:[%s185 + $0x8] sm:$0xff]
        %v222 = vld [vmem:[%s185 + $0x10] sm:$0xff]
        %v223 = vld [vmem:[%s185 + $0x18] sm:$0xff]
        %228 = vrot.lane.b32.xlu0 %v220, 127
        %v229 = vpop.permute.xlu0 %228
        %230 = vrot.lane.b32.xlu0 %v221, 127
        %v231 = vpop.permute.xlu0 %230
        %232 = vrot.lane.b32.xlu0 %v222, 127
        %v233 = vpop.permute.xlu0 %232
        %234 = vrot.lane.b32.xlu0 %v223, 127
        %v235 = vpop.permute.xlu0 %234
        %vm236 = vcmask 1039360
        %v237 = vsel %vm236, %v229, %v231
        %v238 = vsel %vm236, %v233, %v235
        %241 = vst [vmem:[#allocation2 + $0x10] sm:$0xff] %v237
        %242 = vst [vmem:[#allocation2 + $0x18] sm:$0xff] %v238
        %v243 = vld [vmem:[%s185] sm:$0xff]
        %v244 = vld [vmem:[%s185 + $0x8] sm:$0xff]
        %v245 = vld [vmem:[%s185 + $0x10] sm:$0xff]
        %v246 = vld [vmem:[%s185 + $0x18] sm:$0xff]
        %251 = vrot.lane.b32.xlu0 %v243, 119
        %v252 = vpop.permute.xlu0 %251
        %253 = vrot.lane.b32.xlu0 %v244, 119
        %v254 = vpop.permute.xlu0 %253
        %255 = vrot.lane.b32.xlu0 %v245, 119
        %v256 = vpop.permute.xlu0 %255
        %257 = vrot.lane.b32.xlu0 %v246, 119
        %v258 = vpop.permute.xlu0 %257
        %vm259 = vcmask 973824
        %v260 = vsel %vm259, %v252, %v254
        %v261 = vsel %vm259, %v256, %v258
        %264 = vst [vmem:[#allocation2 + $0x20] sm:$0xff] %v260
        %265 = vst [vmem:[#allocation2 + $0x28] sm:$0xff] %v261
        %v266 = vld [vmem:[%s185] sm:$0xff]
        %v267 = vld [vmem:[%s185 + $0x8] sm:$0xff]
        %v268 = vld [vmem:[%s185 + $0x10] sm:$0xff]
        %v269 = vld [vmem:[%s185 + $0x18] sm:$0xff]
        %274 = vrot.lane.b32.xlu0 %v266, 118
        %v275 = vpop.permute.xlu0 %274
        %276 = vrot.lane.b32.xlu0 %v267, 118
        %v277 = vpop.permute.xlu0 %276
        %278 = vrot.lane.b32.xlu0 %v268, 118
        %v279 = vpop.permute.xlu0 %278
        %280 = vrot.lane.b32.xlu0 %v269, 118
        %v281 = vpop.permute.xlu0 %280
        %vm282 = vcmask 965632
        %v283 = vsel %vm282, %v275, %v277
        %v284 = vsel %vm282, %v279, %v281
        %287 = vst [vmem:[#allocation2 + $0x30] sm:$0xff] %v283
        %288 = vst [vmem:[#allocation2 + $0x38] sm:$0xff] %v284
        %v289 = vld [vmem:[#allocation2] sm:$0xff]
        %v290 = vld [vmem:[#allocation2 + $0x8] sm:$0xff]
        %v291 = vld [vmem:[#allocation2 + $0x10] sm:$0xff]
        %v292 = vld [vmem:[#allocation2 + $0x18] sm:$0xff]
        %v293 = vld [vmem:[#allocation2 + $0x20] sm:$0xff]
        %v294 = vld [vmem:[#allocation2 + $0x28] sm:$0xff]
        %v295 = vld [vmem:[#allocation2 + $0x30] sm:$0xff]
        %v296 = vld [vmem:[#allocation2 + $0x38] sm:$0xff]
        %v297 = vld [vmem:[#allocation6] sm:$0xff]
        %v298 = vld [vmem:[#allocation6 + $0x8] sm:$0xff]
        %vm299 = vcmask 523264
        %v301 = vsel %vm299, %v297, 0
        %v304 = vsel %vm299, %v298, 0
        %306 = vmatprep.subr.mxu0 0.0
        %307 = vmatpush1.msra.mxu0 0.0
        %308 = vmatprep.subr.mxu0 0.0
        %309 = vmatpush1.msra.mxu0 0.0
        %310 = vmatprep.subr.mxu0 0.0
        %311 = vmatpush1.msra.mxu0 0.0
        %312 = vmatprep.subr.mxu0 0.0
        %313 = vmatpush1.msra.mxu0 0.0
        %314 = vmatprep.subr.mxu0 0.0
        %315 = vmatpush1.msra.mxu0 0.0
        %316 = vmatprep.subr.mxu0 0.0
        %317 = vmatpush1.msra.mxu0 0.0
        %318 = vmatprep.subr.mxu0 0.0
        %319 = vmatpush1.msra.mxu0 0.0
        %320 = vmatprep.subr.mxu0 0.0
        %321 = vmatpush1.msra.mxu0 0.0
        %322 = vmatprep.subr.mxu0 0.0
        %323 = vmatpush1.msra.mxu0 %v296
        %324 = vmatprep.subr.mxu0 0.0
        %325 = vmatpush1.msra.mxu0 %v295
        %326 = vmatprep.subr.mxu0 0.0
        %327 = vmatpush1.msra.mxu0 %v294
        %328 = vmatprep.subr.mxu0 0.0
        %329 = vmatpush1.msra.mxu0 %v293
        %330 = vmatprep.subr.mxu0 0.0
        %331 = vmatpush1.msra.mxu0 %v292
        %332 = vmatprep.subr.mxu0 0.0
        %333 = vmatpush1.msra.mxu0 %v291
        %334 = vmatprep.subr.mxu0 0.0
        %335 = vmatpush1.msra.mxu0 %v290
        %336 = vmatprep.subr.mxu0 0.0
        %337 = vmatpush1.msra.mxu0 %v289
        %338 = vmatprep.subr.mxu0 0.0
        %339 = vmatpush2.msra.mxu0 0.0
        %340 = vmatprep.subr.mxu0 0.0
        %341 = vmatpush2.msra.mxu0 0.0
        %342 = vmatprep.subr.mxu0 0.0
        %343 = vmatpush2.msra.mxu0 0.0
        %344 = vmatprep.subr.mxu0 0.0
        %345 = vmatpush2.msra.mxu0 0.0
        %346 = vmatprep.subr.mxu0 0.0
        %347 = vmatpush2.msra.mxu0 0.0
        %348 = vmatprep.subr.mxu0 0.0
        %349 = vmatpush2.msra.mxu0 0.0
        %350 = vmatprep.subr.mxu0 0.0
        %351 = vmatpush2.msra.mxu0 0.0
        %352 = vmatprep.subr.mxu0 0.0
        %353 = vmatpush2.msra.mxu0 0.0
        %354 = vmatprep.subr.mxu0 0.0
        %355 = vmatpush2.msra.mxu0 0.0
        %356 = vmatprep.subr.mxu0 0.0
        %357 = vmatpush2.msra.mxu0 0.0
        %358 = vmatprep.subr.mxu0 0.0
        %359 = vmatpush2.msra.mxu0 0.0
        %360 = vmatprep.subr.mxu0 0.0
        %361 = vmatpush2.msra.mxu0 0.0
        %362 = vmatprep.subr.mxu0 0.0
        %363 = vmatpush2.msra.mxu0 0.0
        %364 = vmatprep.subr.mxu0 0.0
        %365 = vmatpush2.msra.mxu0 0.0
        %366 = vmatprep.subr.mxu0 0.0
        %367 = vmatpush2.msra.mxu0 0.0
        %368 = vmatprep.subr.mxu0 0.0
        %369 = vmatpush2.msra.mxu0 0.0
        %370 = vmatprep.mubr.f32.mxu0 0.0
        %371 = vmatmul.mubr.f32.gmra.mxu0 %v301
        %v372 = vpop.f32.mrf.mxu0
        %v373 = vadd.f32 0.0, %v372
        %v374 = vpop.f32.mrf.mxu0
        %375 = vmatprep.mubr.f32.mxu0 0.0
        %376 = vmatmul.mubr.f32.gmra.mxu0 %v304
        %v377 = vpop.f32.mrf.mxu0
        %v378 = vadd.f32 0.0, %v377
        %v379 = vpop.f32.mrf.mxu0
        %380 = vdwg.mxu0
        %v381 = vmax.f32 %v373, 0.0
        %v382 = vmax.f32 %v378, 0.0
        %v383 = vld [vmem:[#allocation8] sm:$0xf]
        %vm384 = vcmask 130048
        %v386 = vsel %vm384, %v383, 0
        %388 = vmatprep.subr.mxu0 0.0
        %389 = vmatpush1.msra.mxu0 0.0
        %390 = vmatprep.subr.mxu0 0.0
        %391 = vmatpush1.msra.mxu0 0.0
        %392 = vmatprep.subr.mxu0 0.0
        %393 = vmatpush1.msra.mxu0 0.0
        %394 = vmatprep.subr.mxu0 0.0
        %395 = vmatpush1.msra.mxu0 0.0
        %396 = vmatprep.subr.mxu0 0.0
        %397 = vmatpush1.msra.mxu0 0.0
        %398 = vmatprep.subr.mxu0 0.0
        %399 = vmatpush1.msra.mxu0 0.0
        %400 = vmatprep.subr.mxu0 0.0
        %401 = vmatpush1.msra.mxu0 0.0
        %402 = vmatprep.subr.mxu0 0.0
        %403 = vmatpush1.msra.mxu0 0.0
        %404 = vmatprep.subr.mxu0 0.0
        %405 = vmatpush1.msra.mxu0 0.0
        %406 = vmatprep.subr.mxu0 0.0
        %407 = vmatpush1.msra.mxu0 0.0
        %408 = vmatprep.subr.mxu0 0.0
        %409 = vmatpush1.msra.mxu0 0.0
        %410 = vmatprep.subr.mxu0 0.0
        %411 = vmatpush1.msra.mxu0 0.0
        %412 = vmatprep.subr.mxu0 0.0
        %413 = vmatpush1.msra.mxu0 0.0
        %414 = vmatprep.subr.mxu0 0.0
        %415 = vmatpush1.msra.mxu0 0.0
        %416 = vmatprep.subr.mxu0 0.0
        %417 = vmatpush1.msra.mxu0 %v382
        %418 = vmatprep.subr.mxu0 0.0
        %419 = vmatpush1.msra.mxu0 %v381
        %420 = vmatprep.subr.mxu0 0.0
        %421 = vmatpush2.msra.mxu0 0.0
        %422 = vmatprep.subr.mxu0 0.0
        %423 = vmatpush2.msra.mxu0 0.0
        %424 = vmatprep.subr.mxu0 0.0
        %425 = vmatpush2.msra.mxu0 0.0
        %426 = vmatprep.subr.mxu0 0.0
        %427 = vmatpush2.msra.mxu0 0.0
        %428 = vmatprep.subr.mxu0 0.0
        %429 = vmatpush2.msra.mxu0 0.0
        %430 = vmatprep.subr.mxu0 0.0
        %431 = vmatpush2.msra.mxu0 0.0
        %432 = vmatprep.subr.mxu0 0.0
        %433 = vmatpush2.msra.mxu0 0.0
        %434 = vmatprep.subr.mxu0 0.0
        %435 = vmatpush2.msra.mxu0 0.0
        %436 = vmatprep.subr.mxu0 0.0
        %437 = vmatpush2.msra.mxu0 0.0
        %438 = vmatprep.subr.mxu0 0.0
        %439 = vmatpush2.msra.mxu0 0.0
        %440 = vmatprep.subr.mxu0 0.0
        %441 = vmatpush2.msra.mxu0 0.0
        %442 = vmatprep.subr.mxu0 0.0
        %443 = vmatpush2.msra.mxu0 0.0
        %444 = vmatprep.subr.mxu0 0.0
        %445 = vmatpush2.msra.mxu0 0.0
        %446 = vmatprep.subr.mxu0 0.0
        %447 = vmatpush2.msra.mxu0 0.0
        %448 = vmatprep.subr.mxu0 0.0
        %449 = vmatpush2.msra.mxu0 0.0
        %450 = vmatprep.subr.mxu0 0.0
        %451 = vmatpush2.msra.mxu0 0.0
        %452 = vmatprep.mubr.f32.mxu0 0.0
        %453 = vmatmul.mubr.f32.gmra.mxu0 %v386
        %v454 = vpop.f32.mrf.mxu0
        %v455 = vadd.f32 0.0, %v454
        %v456 = vpop.f32.mrf.mxu0
        %457 = vdwg.mxu0
        %v458 = vmax.f32 %v455, 0.0
        %459 = vst [vmem:[%s215] sm:$0xf] %v458
        %s460 = sand.u32 %s97, 1
        %s461 = scalar_lea.sflag [#allocation5], %s460
        %s462 = sand.u32 %s97, 1
        %s463 = smul.addr %s462, 4
        %s464 = scalar_lea.vmem [#allocation9], %s463
        // Predicated region
        $region45: #{tpu_custom_call.1} parent=31 // pred_check
          %p465 = pneg %p107
        $region46: #{tpu_custom_call.1} parent=31 // pred_check_branch
          %467 = sbr.rel (%p465) target = $region48
        $region47: #{tpu_custom_call.1} parent=31 // pred_region
          %s469 = ssub.s32 64, 64
          %470 = vsyncadd %s461, %s469
          %s471 = smul.addr %s21, 64
          %s472 = scalar_lea.hbm %s3, %s471
          %s474 = sshll.u32 %s464, 4
          %s475 = int_to_ptr.vmem [resolvable:$true] %s474
          %477 = dma.vmem_to_hbm [thread:$0]  %s475, 64, %s472, %s461
        $region48: #{tpu_custom_call.1} parent=31 // pred_fallthru
          _
      $region32: #{tpu_custom_call.1} parent=5 // pred_fallthru
        _
      %p478 = scmp.le.s32.totalorder 2, %s16
      // Predicated region
      $region49: #{tpu_custom_call.1} parent=5 // pred_check
        %p479 = pneg %p478
      $region50: #{tpu_custom_call.1} parent=5 // pred_check_branch
        %481 = sbr.rel (%p479) target = $region52
      $region51: #{tpu_custom_call.1} parent=5 // pred_region
        %s482 = ssub.s32 %s16, 2
        // Predicated region
        $region53: #{tpu_custom_call.1} parent=51 // pred_check
          %p483 = pneg %p113
        $region54: #{tpu_custom_call.1} parent=51 // pred_check_branch
          %485 = sbr.rel (%p483) target = $region56
        $region55: #{tpu_custom_call.1} parent=51 // pred_region
          %s486 = sand.u32 %s98, 1
          %s487 = scalar_lea.sflag [#allocation5], %s486
          %s488 = sand.u32 %s98, 1
          %s489 = smul.addr %s488, 4
          %s490 = scalar_lea.vmem [#allocation9], %s489
          %491 = dma.done %s487, 64
        $region56: #{tpu_custom_call.1} parent=51 // pred_fallthru
          _
      $region52: #{tpu_custom_call.1} parent=5 // pred_fallthru
        _
    $region6: #{tpu_custom_call.1} parent=1 // loop_footer
      %s20 = sadd.s32 1, %s16
    $region7: #{tpu_custom_call.1} parent=1 // loop_footer_branch
      %15 = sbr.rel target = $region3
    $region8: #{tpu_custom_call.1} parent=1 // loop_exit
      _
    %492 = vsyncpa [#allocation4], 1
    %s493 = scalar_lea.sflag [#allocation4], 1
    %494 = vsyncpa %s493, 1
    %495 = vsyncpa [#allocation7], 1
    %496 = vsyncpa [#allocation5], 1
    %s497 = scalar_lea.sflag [#allocation5], 1
    %498 = vsyncpa %s497, 1

</llo_original>
